<compile_context>
chip_gen: v7x
topology: tpu7x:2x2x1
jax: 0.10.0
libtpu: 0.0.40
codegen_flags: <defaults>
</compile_context>

<pallas_src>
import functools
import math

import jax
import jax.numpy as jnp
import numpy as np
from jax import lax
from jax.experimental import pallas as pl
from jax.experimental.pallas import tpu as pltpu

THETA = 1.5   # unused by the forward pass (kept for parity with __init__)
EPS = 1e-6


def _boundary_loss_kernel(pred_ref, target_ref, aux_ref, out_ref, *,
                          H, Hp, W, TB, N, Npad):
    """One block = TB lane-packed images, shape (Hp, TB*W).

    aux_ref (int32, (3, TB*W)), built on the host (avoids vector int div/rem):
      row 0: 1 where the lane has a left  neighbour inside the same image
      row 1: 1 where the lane has a right neighbour inside the same image
      row 2: image index of the lane within the block (lane // W)
    """
    p = jax.nn.sigmoid(pred_ref[...].astype(jnp.float32))          # (Hp, C)
    t = jnp.clip(target_ref[...].astype(jnp.float32), 0.0, 1.0)    # (Hp, C)
    C = p.shape[1]

    has_left = aux_ref[0:1, :] > 0       # (1, C)
    has_right = aux_ref[1:2, :] > 0      # (1, C)
    row = lax.broadcasted_iota(jnp.int32, (Hp, C), 0)
    not_top = row > 0
    not_bottom = row < (H - 1)

    def edge_mag(x):
        # Horizontal (lane) pass: neighbours via XLU lane rotates; the masks
        # implement per-image zero padding (and stop reads across images).
        xl = jnp.where(has_left, pltpu.roll(x, shift=1, axis=1), 0.0)
        xr = jnp.where(has_right, pltpu.roll(x, shift=C - 1, axis=1), 0.0)
        d = xr - xl               # [-1, 0, 1] along W
        s = xl + 2.0 * x + xr     # [ 1, 2, 1] along W
        # Vertical (sublane) pass, reusing d and s for gx and gy (separability).
        du = jnp.where(not_top, pltpu.roll(d, shift=1, axis=0), 0.0)
        dd = jnp.where(not_bottom, pltpu.roll(d, shift=Hp - 1, axis=0), 0.0)
        su = jnp.where(not_top, pltpu.roll(s, shift=1, axis=0), 0.0)
        sd = jnp.where(not_bottom, pltpu.roll(s, shift=Hp - 1, axis=0), 0.0)
        gx = du + 2.0 * d + dd    # sobel_x = [1,2,1]^T (outer) [-1,0,1]
        gy = sd - su              # sobel_y = [-1,0,1]^T (outer) [ 1,2,1]
        return jnp.clip(jnp.sqrt(gx * gx + gy * gy + EPS), 0.0, 10.0)

    diff = jnp.abs(edge_mag(p) - edge_mag(t))                       # (Hp, C)

    # Only emit masking code if padding actually exists (static decision).
    if (Npad > N) or (Hp > H):
        img = aux_ref[2:3, :] + pl.program_id(0) * TB               # (1, C)
        valid = img < N
        if Hp > H:
            valid = valid & (row < H)
        diff = jnp.where(valid, diff, 0.0)

    # Per-block, lane-dense partial sums; the tiny cross-lane reduce is done
    # by XLA in the wrapper, keeping the grid axis fully parallel.
    out_ref[...] = jnp.sum(diff, axis=0)[None, None, :]


def _choose_tb(N, Hp, W):
    """Images per grid block. Guarantees TB*W is a multiple of 128."""
    m = 128 // math.gcd(W, 128)                  # min images for lane alignment
    tb = max(m, (max(1, 512 // W) // m) * m)     # target ~512 lanes per block
    cap = max(m, ((128 * 1024) // max(1, Hp * W)) // m * m)  # ~512 KiB/input
    tb = min(tb, cap)
    n_cover = ((N + m - 1) // m) * m             # enough to cover the batch
    return max(m, min(tb, n_cover))


def boundary_loss(pred, target):
    """pred, target: (N, 1, H, W) arrays. Returns the scalar BoundaryLoss (f32)."""
    N, C, H, W = pred.shape
    assert C == 1, "reference module's Sobel conv is single-channel"
    pred3 = pred.reshape(N, H, W)
    target3 = target.reshape(N, H, W)

    Hp = ((H + 7) // 8) * 8                       # sublane-aligned row count
    TB = _choose_tb(N, Hp, W)
    num_blocks = (N + TB - 1) // TB
    Npad = num_blocks * TB
    TBW = TB * W

    # Zero-pad batch / rows; padded work is masked out inside the kernel.
    if Npad > N:
        pred3 = jnp.pad(pred3, ((0, Npad - N), (0, 0), (0, 0)))
        target3 = jnp.pad(target3, ((0, Npad - N), (0, 0), (0, 0)))
    if Hp > H:
        pred3 = jnp.pad(pred3, ((0, 0), (0, Hp - H), (0, 0)))
        target3 = jnp.pad(target3, ((0, 0), (0, Hp - H), (0, 0)))

    # Lane-pack the batch: (Npad, Hp, W) -> (Hp, Npad*W). Keeps original dtype.
    pred_p = jnp.transpose(pred3, (1, 0, 2)).reshape(Hp, Npad * W)
    target_p = jnp.transpose(target3, (1, 0, 2)).reshape(Hp, Npad * W)

    # Static per-lane helper table (host-built; no vector int div/rem on TPU).
    lane = np.arange(TBW)
    col = lane % W
    aux = jnp.asarray(np.stack([(col > 0).astype(np.int32),
                                (col < W - 1).astype(np.int32),
                                (lane // W).astype(np.int32)], axis=0))

    kernel = functools.partial(_boundary_loss_kernel,
                               H=H, Hp=Hp, W=W, TB=TB, N=N, Npad=Npad)

    partials = pl.pallas_call(
        kernel,
        out_shape=jax.ShapeDtypeStruct((num_blocks, 1, TBW), jnp.float32),
        grid_spec=pltpu.PrefetchScalarGridSpec(
            num_scalar_prefetch=0,
            grid=(num_blocks,),
            in_specs=[
                pl.BlockSpec((Hp, TBW), lambda b: (0, b)),
                pl.BlockSpec((Hp, TBW), lambda b: (0, b)),
                pl.BlockSpec((3, TBW), lambda b: (0, 0)),
            ],
            out_specs=pl.BlockSpec((1, 1, TBW), lambda b: (b, 0, 0)),
        ),
        compiler_params=pltpu.CompilerParams(
            dimension_semantics=("parallel",)),   # independent per-block partials
    )(pred_p, target_p, aux)

    # F.l1_loss default reduction = 'mean' over all N*C*H*W elements.
    return jnp.sum(partials) / jnp.float32(N * C * H * W)


def _reference_loss(pred, target):
    """Pure-JAX reference mirroring the PyTorch forward (for verification)."""
    p = jax.nn.sigmoid(pred.astype(jnp.float32))
    t = jnp.clip(target.astype(jnp.float32), 0.0, 1.0)
    sobel_x = jnp.array([[-1, 0, 1], [-2, 0, 2], [-1, 0, 1]], jnp.float32)
    sobel_y = jnp.array([[-1, -2, -1], [0, 0, 0], [1, 2, 1]], jnp.float32)
    kx = sobel_x.reshape(1, 1, 3, 3)
    ky = sobel_y.reshape(1, 1, 3, 3)

    def conv(x, k):
        return lax.conv_general_dilated(
            x, k, window_strides=(1, 1), padding=((1, 1), (1, 1)),
            dimension_numbers=("NCHW", "OIHW", "NCHW"))

    epx, epy = conv(p, kx), conv(p, ky)
    etx, ety = conv(t, kx), conv(t, ky)
    ep = jnp.clip(jnp.sqrt(epx ** 2 + epy ** 2 + EPS), 0.0, 10.0)
    et = jnp.clip(jnp.sqrt(etx ** 2 + ety ** 2 + EPS), 0.0, 10.0)
    return jnp.mean(jnp.abs(ep - et))


if __name__ == "__main__":
    key = jax.random.PRNGKey(0)
    k1, k2, k3, k4 = jax.random.split(key, 4)

    # Case 1: shape implied by the module (N, C, H, W) = (2, 1, 16, 16).
    pred = jax.random.normal(k1, (2, 1, 16, 16), jnp.float32)
    target = (jax.random.uniform(k2, (2, 1, 16, 16)) > 0.5).astype(jnp.float32)
    loss = boundary_loss(pred, target)
    jax.block_until_ready(loss)
    ref = _reference_loss(pred, target)
    assert jnp.allclose(loss, ref, rtol=5e-4, atol=1e-5), (loss, ref)

    # Case 2: odd batch and non-aligned H/W exercise the padding/masking paths.
    pred2 = jax.random.normal(k3, (3, 1, 12, 20), jnp.float32)
    target2 = jax.random.uniform(k4, (3, 1, 12, 20), jnp.float32,
                                 minval=-0.5, maxval=1.5)
    loss2 = boundary_loss(pred2, target2)
    jax.block_until_ready(loss2)
    ref2 = _reference_loss(pred2, target2)
    assert jnp.allclose(loss2, ref2, rtol=5e-4, atol=1e-5), (loss2, ref2)

    print("KERNEL_OK")
</pallas_src>

<mosaic_0001>
module attributes {stable_mosaic.version = 11 : i64} {
  func.func @_boundary_loss_kernel(%arg0: i32, %arg1: memref<16x128xf32, #tpu.memory_space<vmem>>, %arg2: memref<16x128xf32, #tpu.memory_space<vmem>>, %arg3: memref<3x128xi32, #tpu.memory_space<vmem>>, %arg4: memref<1x1x128xf32, #tpu.memory_space<vmem>>) attributes {dimension_semantics = [#tpu.dimension_semantics<parallel>], iteration_bounds = array<i64: 1>, scalar_prefetch = 0 : i64, scratch_operands = 0 : i64, tpu.core_type = #tpu.core_type<tc>, window_params = [{transform_indices = @transform_0, window_bounds = array<i64: 16, 128>}, {transform_indices = @transform_1, window_bounds = array<i64: 16, 128>}, {pipeline_mode = #tpu.pipeline_mode<synchronous>, transform_indices = @transform_2, window_bounds = array<i64: 3, 128>}, {transform_indices = @transform_3, window_bounds = array<i64: 1, 1, 128>}]} {
    %c0 = arith.constant 0 : index
    %c0_0 = arith.constant 0 : index
    %0 = vector.load %arg1[%c0, %c0_0] : memref<16x128xf32, #tpu.memory_space<vmem>>, vector<16x128xf32>
    %1 = arith.negf %0 : vector<16x128xf32>
    %2 = math.exp %1 : vector<16x128xf32>
    %cst = arith.constant 1.000000e+00 : f32
    %3 = vector.broadcast %cst : f32 to vector<16x128xf32>
    %4 = arith.addf %3, %2 : vector<16x128xf32>
    %5 = arith.divf %3, %4 : vector<16x128xf32>
    %c0_1 = arith.constant 0 : index
    %c0_2 = arith.constant 0 : index
    %6 = vector.load %arg2[%c0_1, %c0_2] : memref<16x128xf32, #tpu.memory_space<vmem>>, vector<16x128xf32>
    %cst_3 = arith.constant 0.000000e+00 : f32
    %cst_4 = arith.constant 1.000000e+00 : f32
    %7 = vector.broadcast %cst_3 : f32 to vector<16x128xf32>
    %8 = arith.maximumf %7, %6 : vector<16x128xf32>
    %9 = vector.broadcast %cst_4 : f32 to vector<16x128xf32>
    %10 = arith.minimumf %9, %8 : vector<16x128xf32>
    %c0_5 = arith.constant 0 : index
    %c0_6 = arith.constant 0 : index
    %11 = vector.load %arg3[%c0_5, %c0_6] : memref<3x128xi32, #tpu.memory_space<vmem>>, vector<1x128xi32>
    %c0_i32 = arith.constant 0 : i32
    %12 = vector.broadcast %c0_i32 : i32 to vector<1x128xi32>
    %13 = arith.cmpi sgt, %11, %12 : vector<1x128xi32>
    %c1 = arith.constant 1 : index
    %c0_7 = arith.constant 0 : index
    %14 = vector.load %arg3[%c1, %c0_7] : memref<3x128xi32, #tpu.memory_space<vmem>>, vector<1x128xi32>
    %c0_i32_8 = arith.constant 0 : i32
    %15 = vector.broadcast %c0_i32_8 : i32 to vector<1x128xi32>
    %16 = arith.cmpi sgt, %14, %15 : vector<1x128xi32>
    %17 = tpu.iota {dimensions = array<i32: 0>} : vector<16x128xi32>
    %c0_i32_9 = arith.constant 0 : i32
    %18 = vector.broadcast %c0_i32_9 : i32 to vector<16x128xi32>
    %19 = arith.cmpi sgt, %17, %18 : vector<16x128xi32>
    %c15_i32 = arith.constant 15 : i32
    %20 = vector.broadcast %c15_i32 : i32 to vector<16x128xi32>
    %21 = arith.cmpi slt, %17, %20 : vector<16x128xi32>
    %c1_i32 = arith.constant 1 : i32
    %22 = tpu.dynamic_rotate %5 by %c1_i32 dim 1 : vector<16x128xf32>, i32 -> vector<16x128xf32>
    %cst_10 = arith.constant 0.000000e+00 : f32
    %23 = vector.shape_cast %13 : vector<1x128xi1> to vector<1x128xi1>
    %24 = vector.broadcast %23 : vector<1x128xi1> to vector<16x128xi1>
    %25 = vector.broadcast %cst_10 : f32 to vector<16x128xf32>
    %26 = arith.select %24, %22, %25 : vector<16x128xi1>, vector<16x128xf32>
    %c127_i32 = arith.constant 127 : i32
    %27 = tpu.dynamic_rotate %5 by %c127_i32 dim 1 : vector<16x128xf32>, i32 -> vector<16x128xf32>
    %cst_11 = arith.constant 0.000000e+00 : f32
    %28 = vector.shape_cast %16 : vector<1x128xi1> to vector<1x128xi1>
    %29 = vector.broadcast %28 : vector<1x128xi1> to vector<16x128xi1>
    %30 = vector.broadcast %cst_11 : f32 to vector<16x128xf32>
    %31 = arith.select %29, %27, %30 : vector<16x128xi1>, vector<16x128xf32>
    %32 = arith.subf %31, %26 : vector<16x128xf32>
    %cst_12 = arith.constant 2.000000e+00 : f32
    %33 = vector.broadcast %cst_12 : f32 to vector<16x128xf32>
    %34 = arith.mulf %33, %5 : vector<16x128xf32>
    %35 = arith.addf %26, %34 : vector<16x128xf32>
    %36 = arith.addf %35, %31 : vector<16x128xf32>
    %c1_i32_13 = arith.constant 1 : i32
    %37 = tpu.dynamic_rotate %32 by %c1_i32_13 dim 0 : vector<16x128xf32>, i32 -> vector<16x128xf32>
    %cst_14 = arith.constant 0.000000e+00 : f32
    %38 = vector.broadcast %cst_14 : f32 to vector<16x128xf32>
    %39 = arith.select %19, %37, %38 : vector<16x128xi1>, vector<16x128xf32>
    %c15_i32_15 = arith.constant 15 : i32
    %40 = tpu.dynamic_rotate %32 by %c15_i32_15 dim 0 : vector<16x128xf32>, i32 -> vector<16x128xf32>
    %cst_16 = arith.constant 0.000000e+00 : f32
    %41 = vector.broadcast %cst_16 : f32 to vector<16x128xf32>
    %42 = arith.select %21, %40, %41 : vector<16x128xi1>, vector<16x128xf32>
    %c1_i32_17 = arith.constant 1 : i32
    %43 = tpu.dynamic_rotate %36 by %c1_i32_17 dim 0 : vector<16x128xf32>, i32 -> vector<16x128xf32>
    %cst_18 = arith.constant 0.000000e+00 : f32
    %44 = vector.broadcast %cst_18 : f32 to vector<16x128xf32>
    %45 = arith.select %19, %43, %44 : vector<16x128xi1>, vector<16x128xf32>
    %c15_i32_19 = arith.constant 15 : i32
    %46 = tpu.dynamic_rotate %36 by %c15_i32_19 dim 0 : vector<16x128xf32>, i32 -> vector<16x128xf32>
    %cst_20 = arith.constant 0.000000e+00 : f32
    %47 = vector.broadcast %cst_20 : f32 to vector<16x128xf32>
    %48 = arith.select %21, %46, %47 : vector<16x128xi1>, vector<16x128xf32>
    %cst_21 = arith.constant 2.000000e+00 : f32
    %49 = vector.broadcast %cst_21 : f32 to vector<16x128xf32>
    %50 = arith.mulf %49, %32 : vector<16x128xf32>
    %51 = arith.addf %39, %50 : vector<16x128xf32>
    %52 = arith.addf %51, %42 : vector<16x128xf32>
    %53 = arith.subf %48, %45 : vector<16x128xf32>
    %54 = arith.mulf %52, %52 : vector<16x128xf32>
    %55 = arith.mulf %53, %53 : vector<16x128xf32>
    %56 = arith.addf %54, %55 : vector<16x128xf32>
    %cst_22 = arith.constant 9.99999997E-7 : f32
    %57 = vector.broadcast %cst_22 : f32 to vector<16x128xf32>
    %58 = arith.addf %56, %57 : vector<16x128xf32>
    %59 = math.sqrt %58 : vector<16x128xf32>
    %cst_23 = arith.constant 0.000000e+00 : f32
    %cst_24 = arith.constant 1.000000e+01 : f32
    %60 = vector.broadcast %cst_23 : f32 to vector<16x128xf32>
    %61 = arith.maximumf %60, %59 : vector<16x128xf32>
    %62 = vector.broadcast %cst_24 : f32 to vector<16x128xf32>
    %63 = arith.minimumf %62, %61 : vector<16x128xf32>
    %c1_i32_25 = arith.constant 1 : i32
    %64 = tpu.dynamic_rotate %10 by %c1_i32_25 dim 1 : vector<16x128xf32>, i32 -> vector<16x128xf32>
    %cst_26 = arith.constant 0.000000e+00 : f32
    %65 = vector.shape_cast %13 : vector<1x128xi1> to vector<1x128xi1>
    %66 = vector.broadcast %65 : vector<1x128xi1> to vector<16x128xi1>
    %67 = vector.broadcast %cst_26 : f32 to vector<16x128xf32>
    %68 = arith.select %66, %64, %67 : vector<16x128xi1>, vector<16x128xf32>
    %c127_i32_27 = arith.constant 127 : i32
    %69 = tpu.dynamic_rotate %10 by %c127_i32_27 dim 1 : vector<16x128xf32>, i32 -> vector<16x128xf32>
    %cst_28 = arith.constant 0.000000e+00 : f32
    %70 = vector.shape_cast %16 : vector<1x128xi1> to vector<1x128xi1>
    %71 = vector.broadcast %70 : vector<1x128xi1> to vector<16x128xi1>
    %72 = vector.broadcast %cst_28 : f32 to vector<16x128xf32>
    %73 = arith.select %71, %69, %72 : vector<16x128xi1>, vector<16x128xf32>
    %74 = arith.subf %73, %68 : vector<16x128xf32>
    %cst_29 = arith.constant 2.000000e+00 : f32
    %75 = vector.broadcast %cst_29 : f32 to vector<16x128xf32>
    %76 = arith.mulf %75, %10 : vector<16x128xf32>
    %77 = arith.addf %68, %76 : vector<16x128xf32>
    %78 = arith.addf %77, %73 : vector<16x128xf32>
    %c1_i32_30 = arith.constant 1 : i32
    %79 = tpu.dynamic_rotate %74 by %c1_i32_30 dim 0 : vector<16x128xf32>, i32 -> vector<16x128xf32>
    %cst_31 = arith.constant 0.000000e+00 : f32
    %80 = vector.broadcast %cst_31 : f32 to vector<16x128xf32>
    %81 = arith.select %19, %79, %80 : vector<16x128xi1>, vector<16x128xf32>
    %c15_i32_32 = arith.constant 15 : i32
    %82 = tpu.dynamic_rotate %74 by %c15_i32_32 dim 0 : vector<16x128xf32>, i32 -> vector<16x128xf32>
    %cst_33 = arith.constant 0.000000e+00 : f32
    %83 = vector.broadcast %cst_33 : f32 to vector<16x128xf32>
    %84 = arith.select %21, %82, %83 : vector<16x128xi1>, vector<16x128xf32>
    %c1_i32_34 = arith.constant 1 : i32
    %85 = tpu.dynamic_rotate %78 by %c1_i32_34 dim 0 : vector<16x128xf32>, i32 -> vector<16x128xf32>
    %cst_35 = arith.constant 0.000000e+00 : f32
    %86 = vector.broadcast %cst_35 : f32 to vector<16x128xf32>
    %87 = arith.select %19, %85, %86 : vector<16x128xi1>, vector<16x128xf32>
    %c15_i32_36 = arith.constant 15 : i32
    %88 = tpu.dynamic_rotate %78 by %c15_i32_36 dim 0 : vector<16x128xf32>, i32 -> vector<16x128xf32>
    %cst_37 = arith.constant 0.000000e+00 : f32
    %89 = vector.broadcast %cst_37 : f32 to vector<16x128xf32>
    %90 = arith.select %21, %88, %89 : vector<16x128xi1>, vector<16x128xf32>
    %cst_38 = arith.constant 2.000000e+00 : f32
    %91 = vector.broadcast %cst_38 : f32 to vector<16x128xf32>
    %92 = arith.mulf %91, %74 : vector<16x128xf32>
    %93 = arith.addf %81, %92 : vector<16x128xf32>
    %94 = arith.addf %93, %84 : vector<16x128xf32>
    %95 = arith.subf %90, %87 : vector<16x128xf32>
    %96 = arith.mulf %94, %94 : vector<16x128xf32>
    %97 = arith.mulf %95, %95 : vector<16x128xf32>
    %98 = arith.addf %96, %97 : vector<16x128xf32>
    %cst_39 = arith.constant 9.99999997E-7 : f32
    %99 = vector.broadcast %cst_39 : f32 to vector<16x128xf32>
    %100 = arith.addf %98, %99 : vector<16x128xf32>
    %101 = math.sqrt %100 : vector<16x128xf32>
    %cst_40 = arith.constant 0.000000e+00 : f32
    %cst_41 = arith.constant 1.000000e+01 : f32
    %102 = vector.broadcast %cst_40 : f32 to vector<16x128xf32>
    %103 = arith.maximumf %102, %101 : vector<16x128xf32>
    %104 = vector.broadcast %cst_41 : f32 to vector<16x128xf32>
    %105 = arith.minimumf %104, %103 : vector<16x128xf32>
    %106 = arith.subf %63, %105 : vector<16x128xf32>
    %107 = math.absf %106 : vector<16x128xf32>
    %c2 = arith.constant 2 : index
    %c0_42 = arith.constant 0 : index
    %108 = vector.load %arg3[%c2, %c0_42] : memref<3x128xi32, #tpu.memory_space<vmem>>, vector<1x128xi32>
    %c8_i32 = arith.constant 8 : i32
    %109 = arith.muli %arg0, %c8_i32 : i32
    %110 = vector.broadcast %109 : i32 to vector<1x128xi32>
    %111 = arith.addi %108, %110 : vector<1x128xi32>
    %c2_i32 = arith.constant 2 : i32
    %112 = vector.broadcast %c2_i32 : i32 to vector<1x128xi32>
    %113 = arith.cmpi slt, %111, %112 : vector<1x128xi32>
    %cst_43 = arith.constant 0.000000e+00 : f32
    %114 = vector.shape_cast %113 : vector<1x128xi1> to vector<1x128xi1>
    %115 = vector.broadcast %114 : vector<1x128xi1> to vector<16x128xi1>
    %116 = vector.broadcast %cst_43 : f32 to vector<16x128xf32>
    %117 = arith.select %115, %107, %116 : vector<16x128xi1>, vector<16x128xf32>
    %cst_44 = arith.constant dense<0.000000e+00> : vector<128xf32>
    %118 = vector.multi_reduction <add>, %117, %cst_44 [0] : vector<16x128xf32> to vector<128xf32>
    %119 = vector.shape_cast %118 : vector<128xf32> to vector<1x1x128xf32>
    %c0_45 = arith.constant 0 : index
    %c0_46 = arith.constant 0 : index
    %c0_47 = arith.constant 0 : index
    %120 = vector.load %arg4[%c0_45, %c0_46, %c0_47] : memref<1x1x128xf32, #tpu.memory_space<vmem>>, vector<1x1x128xf32>
    tpu.vector_store %arg4[%c0_45, %c0_46, %c0_47], %119 {strides = array<i32>} : memref<1x1x128xf32, #tpu.memory_space<vmem>>, vector<1x1x128xf32>,
    return
  }
  func.func @transform_0(%arg0: i32) -> (i32, i32) {
    %c0_i32 = arith.constant 0 : i32
    %c0_i32_0 = arith.constant 0 : i32
    return %c0_i32, %arg0 : i32, i32
  }
  func.func @transform_1(%arg0: i32) -> (i32, i32) {
    %c0_i32 = arith.constant 0 : i32
    %c0_i32_0 = arith.constant 0 : i32
    return %c0_i32, %arg0 : i32, i32
  }
  func.func @transform_2(%arg0: i32) -> (i32, i32) {
    %c0_i32 = arith.constant 0 : i32
    %c0_i32_0 = arith.constant 0 : i32
    %c0_i32_1 = arith.constant 0 : i32
    return %c0_i32, %c0_i32_0 : i32, i32
  }
  func.func @transform_3(%arg0: i32) -> (i32, i32, i32) {
    %c0_i32 = arith.constant 0 : i32
    %c0_i32_0 = arith.constant 0 : i32
    %c0_i32_1 = arith.constant 0 : i32
    return %arg0, %c0_i32, %c0_i32_0 : i32, i32, i32
  }
}

</mosaic_0001>

<llo_original>
// kernel: tpu_custom_call.1
$region0: #{tpu_custom_call.1}
  #allocation0 [shape = 'u32[]', space=smem, size = 0x4, offset = 0x4, fixed_abs, tag = 'smem constant byte address 0x4 - core index']
  #allocation1 [shape = 'u32[144,128]{1,0:T(1,128)}', space=vmem, size = 0x12000, scoped, tag = 'internal scratch']
  %s0 = inlined_call_operand.hbm [shape: f32[16,128], index: 0, kind: input, shape index: {}]
  %s1 = inlined_call_operand.hbm [shape: f32[16,128], index: 1, kind: input, shape index: {}]
  %s2 = inlined_call_operand.vmem [shape: s32[3,128], index: 2, kind: input, shape index: {}]
  %s3 = inlined_call_operand.hbm [shape: f32[1,1,128], index: 3, kind: output, shape index: {}]
  %s4 = sld [smem:[#allocation0]]
  $region30: #{tpu_custom_call.1} parent=0
    _
  %s6 = ssub.s32 1, %s4
  %s7 = scalar_select 0, %s6, %s4
  $region1: #{tpu_custom_call.1} parent=0
    #allocation2 [shape = 'u8[8192]{0}', space=vmem, size = 0x2000, scoped, tag = 'input window, operand 0, single buffered']
    #allocation3 [shape = 's32[1]{0}', space=sflag, size = 0x4, scoped, tag = 'scoped memory for tpu_custom_call.1']
    #allocation4 [shape = 's32[1]{0}', space=sflag, size = 0x4, scoped, tag = 'scoped memory for tpu_custom_call.1']
    #allocation5 [shape = 'u8[8192]{0}', space=vmem, size = 0x2000, scoped, tag = 'input window, operand 1, single buffered']
    #allocation6 [shape = 's32[1]{0}', space=sflag, size = 0x4, scoped, tag = 'scoped memory for tpu_custom_call.1']
    #allocation7 [shape = 'u8[512]{0}', space=vmem, size = 0x400, scoped, tag = 'output window, operand 0, single buffered']
    %8 = vsyncpa [#allocation3], 0
    %9 = vsyncpa [#allocation6], 0
    %10 = vsyncpa [#allocation4], 0
    // Predicated region
    $region2: #{tpu_custom_call.1} parent=1 // pred_check
      _
    $region3: #{tpu_custom_call.1} parent=1 // pred_check_branch
      %12 = sbr.rel (0) target = $region5
    $region4: #{tpu_custom_call.1} parent=1 // pred_region
      %s14 = ssub.s32 256, 256
      %15 = vsyncadd [#allocation3], %s14
      %s16 = sshll.u32 [#allocation2], 4
      %s17 = int_to_ptr.vmem [resolvable:$true] %s16
      %22 = dma.hbm_to_vmem [thread:$0]  %s0, 256, %s17, [#allocation3], 128, 128, 8
    $region5: #{tpu_custom_call.1} parent=1 // pred_fallthru
      _
    // Predicated region
    $region6: #{tpu_custom_call.1} parent=1 // pred_check
      _
    $region7: #{tpu_custom_call.1} parent=1 // pred_check_branch
      %24 = sbr.rel (0) target = $region9
    $region8: #{tpu_custom_call.1} parent=1 // pred_region
      %s26 = ssub.s32 256, 256
      %27 = vsyncadd [#allocation6], %s26
      %s28 = sshll.u32 [#allocation5], 4
      %s29 = int_to_ptr.vmem [resolvable:$true] %s28
      %34 = dma.hbm_to_vmem [thread:$0]  %s1, 256, %s29, [#allocation6], 128, 128, 8
    $region9: #{tpu_custom_call.1} parent=1 // pred_fallthru
      _
    // Predicated region
    $region10: #{tpu_custom_call.1} parent=1 // pred_check
      _
    $region11: #{tpu_custom_call.1} parent=1 // pred_check_branch
      %36 = sbr.rel (0) target = $region13
    $region12: #{tpu_custom_call.1} parent=1 // pred_region
      _
    $region13: #{tpu_custom_call.1} parent=1 // pred_fallthru
      _
    // Predicated region
    $region14: #{tpu_custom_call.1} parent=1 // pred_check
      _
    $region15: #{tpu_custom_call.1} parent=1 // pred_check_branch
      %38 = sbr.rel (0) target = $region17
    $region16: #{tpu_custom_call.1} parent=1 // pred_region
      %39 = dma.done [#allocation3], 256
    $region17: #{tpu_custom_call.1} parent=1 // pred_fallthru
      _
    // Predicated region
    $region18: #{tpu_custom_call.1} parent=1 // pred_check
      _
    $region19: #{tpu_custom_call.1} parent=1 // pred_check_branch
      %41 = sbr.rel (0) target = $region21
    $region20: #{tpu_custom_call.1} parent=1 // pred_region
      %42 = dma.done [#allocation6], 256
    $region21: #{tpu_custom_call.1} parent=1 // pred_fallthru
      _
    %v43 = vld [vmem:[#allocation2] sm:$0xff]
    %v44 = vld [vmem:[#allocation2 + $0x8] sm:$0xff]
    %v45 = vxor.u32 %v43, 2147483648
    %v46 = vxor.u32 %v44, 2147483648
    %v47 = vmul.f32 %v45, 1.442695
    %v48 = vpow.pop %v47
    %v49 = vmul.f32 %v46, 1.442695
    %v50 = vpow.pop %v49
    %v51 = vadd.f32 %v48, 1.0
    %v52 = vadd.f32 %v50, 1.0
    %v53 = vrcp.pop %v51
    %v54 = vmul.f32 1.0, %v53
    %v55 = vrcp.pop %v52
    %v56 = vmul.f32 1.0, %v55
    %v57 = vld [vmem:[#allocation5] sm:$0xff]
    %v58 = vld [vmem:[#allocation5 + $0x8] sm:$0xff]
    %v59 = vmax.f32 %v57, 0.0
    %v60 = vmax.f32 %v58, 0.0
    %v61 = vmin.f32 %v59, 1.0
    %v62 = vmin.f32 %v60, 1.0
    %v63 = vld [vmem:[%s2] sm:$0x1]
    %vm64 = vcmp.gt.s32.totalorder %v63, 0
    %v65 = vld [vmem:[%s2 + $0x1] sm:$0x1]
    %vm66 = vcmp.gt.s32.totalorder %v65, 0
    %v67 = vlaneseq
    %v68 = vshrl.u32 %v67, 7
    %v69 = vadd.s32 %v68, 8
    %vm70 = vcmp.gt.s32.totalorder %v68, 0
    %vm71 = vcmp.gt.s32.totalorder %v69, 0
    %vm72 = vcmp.lt.s32.totalorder %v68, 15
    %vm73 = vcmp.lt.s32.totalorder %v69, 15
    %74 = vrot.lane.b32.xlu0 %v54, 1
    %v75 = vpop.permute.xlu0 %74
    %76 = vrot.lane.b32.xlu0 %v56, 1
    %v77 = vpop.permute.xlu0 %76
    %v78 = vsel %vm64, 1, 0
    %v79 = vlaneseq
    %v80 = vshrl.u32 %v79, 7
    %v81 = vsub.s32 0, %v80
    %v82 = vrot.slane %v78, %v81
    %vm83 = vcmp.eq.s32.totalorder %v82, 1
    %v84 = vsel %vm83, %v75, 0.0
    %v85 = vsel %vm83, %v77, 0.0
    %86 = vrot.lane.b32.xlu0 %v54, 127
    %v87 = vpop.permute.xlu0 %86
    %88 = vrot.lane.b32.xlu0 %v56, 127
    %v89 = vpop.permute.xlu0 %88
    %v90 = vsel %vm66, 1, 0
    %v91 = vlaneseq
    %v92 = vshrl.u32 %v91, 7
    %v93 = vsub.s32 0, %v92
    %v94 = vrot.slane %v90, %v93
    %vm95 = vcmp.eq.s32.totalorder %v94, 1
    %v96 = vsel %vm95, %v87, 0.0
    %v97 = vsel %vm95, %v89, 0.0
    %v98 = vsub.f32 %v96, %v84
    %v99 = vsub.f32 %v97, %v85
    %v100 = vmul.f32 %v54, 2.0
    %v101 = vmul.f32 %v56, 2.0
    %v102 = vadd.f32 %v84, %v100
    %v103 = vadd.f32 %v85, %v101
    %v104 = vadd.f32 %v102, %v96
    %v105 = vadd.f32 %v103, %v97
    %v106 = vrot.slane %v98, 7
    %v107 = vrot.slane %v99, 7
    %vm108 = vcmp.lt.s32.totalorder %v68, 1
    %v109 = vsel %vm108, %v106, %v107
    %v110 = vsel %vm108, %v107, %v106
    %v111 = vsel %vm70, %v110, 0.0
    %v112 = vsel %vm71, %v109, 0.0
    %v113 = vrot.slane %v98, 1
    %v114 = vrot.slane %v99, 1
    %vm115 = vcmp.lt.s32.totalorder %v68, 7
    %v116 = vsel %vm115, %v113, %v114
    %v117 = vsel %vm115, %v114, %v113
    %v118 = vsel %vm72, %v116, 0.0
    %v119 = vsel %vm73, %v117, 0.0
    %v120 = vrot.slane %v104, 7
    %v121 = vrot.slane %v105, 7
    %v122 = vsel %vm108, %v120, %v121
    %v123 = vsel %vm108, %v121, %v120
    %v124 = vsel %vm70, %v123, 0.0
    %v125 = vsel %vm71, %v122, 0.0
    %v126 = vrot.slane %v104, 1
    %v127 = vrot.slane %v105, 1
    %v128 = vsel %vm115, %v126, %v127
    %v129 = vsel %vm115, %v127, %v126
    %v130 = vsel %vm72, %v128, 0.0
    %v131 = vsel %vm73, %v129, 0.0
    %v132 = vmul.f32 %v98, 2.0
    %v133 = vmul.f32 %v99, 2.0
    %v134 = vadd.f32 %v111, %v132
    %v135 = vadd.f32 %v112, %v133
    %v136 = vadd.f32 %v134, %v118
    %v137 = vadd.f32 %v135, %v119
    %v138 = vsub.f32 %v130, %v124
    %v139 = vsub.f32 %v131, %v125
    %v140 = vmul.f32 %v136, %v136
    %v141 = vmul.f32 %v137, %v137
    %v142 = vmul.f32 %v138, %v138
    %v143 = vmul.f32 %v139, %v139
    %v144 = vadd.f32 %v140, %v142
    %v145 = vadd.f32 %v141, %v143
    %v146 = vadd.f32 %v144, 1e-06
    %v147 = vadd.f32 %v145, 1e-06
    %v148 = vrsqrt.pop %v146
    %v149 = vmul.f32 %v146, %v148
    %vm150 = vcmp.eq.f32.partialorder %v146, inf
    %v151 = vsel %vm150, %v146, %v149
    %vm152 = vcmp.eq.f32.partialorder %v146, 0.0
    %v153 = vand.u32 %v146, 2147483648
    %v154 = vsel %vm152, %v153, %v151
    %v155 = vrsqrt.pop %v147
    %v156 = vmul.f32 %v147, %v155
    %vm157 = vcmp.eq.f32.partialorder %v147, inf
    %v158 = vsel %vm157, %v147, %v156
    %vm159 = vcmp.eq.f32.partialorder %v147, 0.0
    %v160 = vand.u32 %v147, 2147483648
    %v161 = vsel %vm159, %v160, %v158
    %v162 = vmax.f32 %v154, 0.0
    %v163 = vmax.f32 %v161, 0.0
    %v164 = vmin.f32 %v162, 10.0
    %v165 = vmin.f32 %v163, 10.0
    %166 = vrot.lane.b32.xlu0 %v61, 1
    %v167 = vpop.permute.xlu0 %166
    %168 = vrot.lane.b32.xlu0 %v62, 1
    %v169 = vpop.permute.xlu0 %168
    %v170 = vsel %vm83, %v167, 0.0
    %v171 = vsel %vm83, %v169, 0.0
    %172 = vrot.lane.b32.xlu0 %v61, 127
    %v173 = vpop.permute.xlu0 %172
    %174 = vrot.lane.b32.xlu0 %v62, 127
    %v175 = vpop.permute.xlu0 %174
    %v176 = vsel %vm95, %v173, 0.0
    %v177 = vsel %vm95, %v175, 0.0
    %v178 = vsub.f32 %v176, %v170
    %v179 = vsub.f32 %v177, %v171
    %v180 = vmul.f32 %v61, 2.0
    %v181 = vmul.f32 %v62, 2.0
    %v182 = vadd.f32 %v170, %v180
    %v183 = vadd.f32 %v171, %v181
    %v184 = vadd.f32 %v182, %v176
    %v185 = vadd.f32 %v183, %v177
    %v186 = vrot.slane %v178, 7
    %v187 = vrot.slane %v179, 7
    %v188 = vsel %vm108, %v186, %v187
    %v189 = vsel %vm108, %v187, %v186
    %v190 = vsel %vm70, %v189, 0.0
    %v191 = vsel %vm71, %v188, 0.0
    %v192 = vrot.slane %v178, 1
    %v193 = vrot.slane %v179, 1
    %v194 = vsel %vm115, %v192, %v193
    %v195 = vsel %vm115, %v193, %v192
    %v196 = vsel %vm72, %v194, 0.0
    %v197 = vsel %vm73, %v195, 0.0
    %v198 = vrot.slane %v184, 7
    %v199 = vrot.slane %v185, 7
    %v200 = vsel %vm108, %v198, %v199
    %v201 = vsel %vm108, %v199, %v198
    %v202 = vsel %vm70, %v201, 0.0
    %v203 = vsel %vm71, %v200, 0.0
    %v204 = vrot.slane %v184, 1
    %v205 = vrot.slane %v185, 1
    %v206 = vsel %vm115, %v204, %v205
    %v207 = vsel %vm115, %v205, %v204
    %v208 = vsel %vm72, %v206, 0.0
    %v209 = vsel %vm73, %v207, 0.0
    %v210 = vmul.f32 %v178, 2.0
    %v211 = vmul.f32 %v179, 2.0
    %v212 = vadd.f32 %v190, %v210
    %v213 = vadd.f32 %v191, %v211
    %v214 = vadd.f32 %v212, %v196
    %v215 = vadd.f32 %v213, %v197
    %v216 = vsub.f32 %v208, %v202
    %v217 = vsub.f32 %v209, %v203
    %v218 = vmul.f32 %v214, %v214
    %v219 = vmul.f32 %v215, %v215
    %v220 = vmul.f32 %v216, %v216
    %v221 = vmul.f32 %v217, %v217
    %v222 = vadd.f32 %v218, %v220
    %v223 = vadd.f32 %v219, %v221
    %v224 = vadd.f32 %v222, 1e-06
    %v225 = vadd.f32 %v223, 1e-06
    %v226 = vrsqrt.pop %v224
    %v227 = vmul.f32 %v224, %v226
    %vm228 = vcmp.eq.f32.partialorder %v224, inf
    %v229 = vsel %vm228, %v224, %v227
    %vm230 = vcmp.eq.f32.partialorder %v224, 0.0
    %v231 = vand.u32 %v224, 2147483648
    %v232 = vsel %vm230, %v231, %v229
    %v233 = vrsqrt.pop %v225
    %v234 = vmul.f32 %v225, %v233
    %vm235 = vcmp.eq.f32.partialorder %v225, inf
    %v236 = vsel %vm235, %v225, %v234
    %vm237 = vcmp.eq.f32.partialorder %v225, 0.0
    %v238 = vand.u32 %v225, 2147483648
    %v239 = vsel %vm237, %v238, %v236
    %v240 = vmax.f32 %v232, 0.0
    %v241 = vmax.f32 %v239, 0.0
    %v242 = vmin.f32 %v240, 10.0
    %v243 = vmin.f32 %v241, 10.0
    %v244 = vsub.f32 %v164, %v242
    %v245 = vsub.f32 %v165, %v243
    %v246 = vand.u32 2147483647, %v244
    %v247 = vand.u32 2147483647, %v245
    %v248 = vld [vmem:[%s2 + $0x2] sm:$0x1]
    %s249 = smul.u32 0, 8
    %v250 = vstv %s249
    %v251 = vadd.s32 %v248, %v250
    %vm252 = vcmp.lt.s32.totalorder %v251, 2
    %v253 = vsel %vm252, 1, 0
    %v254 = vlaneseq
    %v255 = vshrl.u32 %v254, 7
    %v256 = vsub.s32 0, %v255
    %v257 = vrot.slane %v253, %v256
    %vm258 = vcmp.eq.s32.totalorder %v257, 1
    %v259 = vsel %vm258, %v246, 0.0
    %v260 = vsel %vm258, %v247, 0.0
    %v261 = vadd.f32 %v259, %v260
    %v262 = vrot.slane %v261, 4
    %v263 = vadd.f32 %v261, %v262
    %v264 = vrot.slane %v263, 2
    %v265 = vadd.f32 %v263, %v264
    %v266 = vrot.slane %v265, 1
    %v267 = vadd.f32 %v265, %v266
    %268 = vst [vmem:[#allocation7] sm:$0x1] %v267
    // Predicated region
    $region22: #{tpu_custom_call.1} parent=1 // pred_check
      _
    $region23: #{tpu_custom_call.1} parent=1 // pred_check_branch
      %270 = sbr.rel (0) target = $region25
    $region24: #{tpu_custom_call.1} parent=1 // pred_region
      %s272 = ssub.s32 16, 16
      %273 = vsyncadd [#allocation4], %s272
      %s275 = sshll.u32 [#allocation7], 4
      %s276 = int_to_ptr.vmem [resolvable:$true] %s275
      %278 = dma.vmem_to_hbm [thread:$0]  %s276, 16, %s3, [#allocation4]
    $region25: #{tpu_custom_call.1} parent=1 // pred_fallthru
      _
    // Predicated region
    $region26: #{tpu_custom_call.1} parent=1 // pred_check
      _
    $region27: #{tpu_custom_call.1} parent=1 // pred_check_branch
      %280 = sbr.rel (0) target = $region29
    $region28: #{tpu_custom_call.1} parent=1 // pred_region
      %281 = dma.done [#allocation4], 16
    $region29: #{tpu_custom_call.1} parent=1 // pred_fallthru
      _
    %282 = vsyncpa [#allocation3], 1
    %283 = vsyncpa [#allocation6], 1
    %284 = vsyncpa [#allocation4], 1

</llo_original>
